<compile_context>
chip_gen: v7x
topology: tpu7x:2x2x1
jax: 0.10.0
libtpu: 0.0.40
codegen_flags: <defaults>
</compile_context>

<pallas_src>
import jax
import jax.numpy as jnp
from jax import lax
from jax.experimental import pallas as pl
from jax.experimental.pallas import tpu as pltpu


_TB_SINGLE = 512      # up to this batch, run the whole batch as one block
_TB_MAX = 2048        # max rows per grid step (safe vs v5e's 16 MiB scoped VMEM)


def _round_up(n, m):
    return ((n + m - 1) // m) * m


def _choose_tile(B):
    """Pick the batch tile.

    * Small B: one whole-array block (block dims == array dims, so no
      (8,128) divisibility constraints and zero pipeline overhead).
    * Large B: a multiple-of-128 tile (lane-dense output constraint), sized
      so the grid has >= 4 steps (keeps both v7x TensorCores busy) and
      capped at _TB_MAX so double-buffered tiles fit every generation's
      default scoped VMEM.
    """
    if B <= _TB_SINGLE:
        return B
    return min(_TB_MAX, _round_up(pl.cdiv(B, 4), 128))


def _agent_kernel(x_ref, geo_ref, w1x_ref, w1g_ref, b1_ref, wd_ref, bd_ref, o_ref):
    """One batch tile.

    x_ref:   [TB, Dx]      geo_ref: [TB, G]
    w1x_ref: [Dx, H]       w1g_ref: [G, H]       b1_ref: [1, H]
    wd_ref:  [1, H]  (w2[0]-w2[1])               bd_ref: [1, 1] (b2[0]-b2[1])
    o_ref:   [2, TB]  (row 0: P(class 0), row 1: P(class 1)) — lane-dense
    """
    # Stream in the caller's dtype; cast to f32 in-kernel (no-op for f32).
    x = x_ref[...].astype(jnp.float32)
    geo = geo_ref[...].astype(jnp.float32)

    # affine1 with the concat fused away (W1 split), f32 accumulation on MXU.
    h = jnp.dot(x, w1x_ref[...], preferred_element_type=jnp.float32)
    h = h + jnp.dot(geo, w1g_ref[...], preferred_element_type=jnp.float32)
    h = jnp.maximum(h + b1_ref[...], 0.0)                     # [TB, H]

    # affine2 + 2-class softmax rewritten as sigmoid of the logit difference,
    # computed directly in the transposed (lane-dense) layout:
    #   z  = h @ (w2[0]-w2[1]) + (b2[0]-b2[1])    -> [1, TB] via trans-B dot
    #   p0 = sigmoid(z),  p1 = 1 - p0             (exact 2-class softmax)
    z = lax.dot_general(wd_ref[...], h, (((1,), (1,)), ((), ())),
                        preferred_element_type=jnp.float32)   # [1, TB]
    z = z + bd_ref[...]
    p0 = 1.0 / (1.0 + jnp.exp(-z))                            # one exp per row
    o_ref[...] = jnp.concatenate([p0, 1.0 - p0], axis=0).astype(o_ref.dtype)


def prepare_params(w1, b1, w2, b2, x_dim):
    """One-time layout prep (PyTorch [out,in] -> row-major [in,out] + the
    2-class softmax -> sigmoid reduction vector). Do NOT redo per call."""
    H = w1.shape[0]
    w1x_t = jnp.asarray(w1[:, :x_dim].T, jnp.float32)          # [Dx, H]
    w1g_t = jnp.asarray(w1[:, x_dim:].T, jnp.float32)          # [G,  H]
    b1_2d = jnp.asarray(b1, jnp.float32).reshape(1, H)
    w_diff = jnp.asarray(w2[0, :] - w2[1, :], jnp.float32).reshape(1, H)
    b_diff = jnp.asarray(b2[0] - b2[1], jnp.float32).reshape(1, 1)
    return w1x_t, w1g_t, b1_2d, w_diff, b_diff


@jax.jit
def agent_forward(x, geometric_features, w1x_t, w1g_t, b1_2d, w_diff, b_diff):
    """x: [B, feat_dim+2], geometric_features: [B, 6]  ->  probs [B, 2]."""
    B, Dx = x.shape
    G = geometric_features.shape[1]
    H = w1x_t.shape[1]

    tb = _choose_tile(B)
    grid = (pl.cdiv(B, tb),)        # partial last block allowed; no wrapper pad
    # NOTE: rows are independent — the garbage tail rows of a partial last
    # block are discarded by the wrapper slice; never add cross-row reductions.

    cost = pl.CostEstimate(
        flops=2 * B * H * (Dx + G + 1),
        transcendentals=B,
        bytes_accessed=4 * (B * (Dx + G + 2) + H * (Dx + G + 2) + 1),
    )

    out_t = pl.pallas_call(
        _agent_kernel,
        out_shape=jax.ShapeDtypeStruct((2, B), jnp.float32),
        grid=grid,
        in_specs=[
            pl.BlockSpec((tb, Dx), lambda i: (i, 0)),   # x tile  (streamed)
            pl.BlockSpec((tb, G), lambda i: (i, 0)),    # geo tile(streamed)
            pl.BlockSpec((Dx, H), lambda i: (0, 0)),    # W1_x    (resident)
            pl.BlockSpec((G, H), lambda i: (0, 0)),     # W1_geo  (resident)
            pl.BlockSpec((1, H), lambda i: (0, 0)),     # b1      (resident)
            pl.BlockSpec((1, H), lambda i: (0, 0)),     # w_diff  (resident)
            pl.BlockSpec((1, 1), lambda i: (0, 0)),     # b_diff  (resident)
        ],
        out_specs=pl.BlockSpec((2, tb), lambda i: (0, i)),  # lane-dense output
        compiler_params=pltpu.CompilerParams(
            dimension_semantics=("parallel",)),         # batch rows independent
        cost_estimate=cost,
    )(x, geometric_features, w1x_t, w1g_t, b1_2d, w_diff, b_diff)

    return out_t.T                                       # [B, 2] (PyTorch layout)


def init_params(key, feat_dim, hidden_size):
    """Deterministic PyTorch-style uniform(-1/sqrt(fan_in), 1/sqrt(fan_in)) init."""
    in_dim = feat_dim + 2 + 6
    k1, k2, k3, k4 = jax.random.split(key, 4)
    bound1 = 1.0 / jnp.sqrt(in_dim)
    bound2 = 1.0 / jnp.sqrt(hidden_size)
    w1 = jax.random.uniform(k1, (hidden_size, in_dim), jnp.float32, -bound1, bound1)
    b1 = jax.random.uniform(k2, (hidden_size,), jnp.float32, -bound1, bound1)
    w2 = jax.random.uniform(k3, (2, hidden_size), jnp.float32, -bound2, bound2)
    b2 = jax.random.uniform(k4, (2,), jnp.float32, -bound2, bound2)
    return w1, b1, w2, b2


if __name__ == "__main__":
    feat_dim = 24          # -> x_dim = feat_dim + 2 = 26, total in_dim = 32
    hidden_size = 32

    key = jax.random.PRNGKey(0)
    kp, kx, kg = jax.random.split(key, 3)
    w1, b1, w2, b2 = init_params(kp, feat_dim, hidden_size)
    params = prepare_params(w1, b1, w2, b2, feat_dim + 2)

    def ref_forward(x, geo):
        xin = jnp.concatenate([x, geo], axis=1)
        h = jnp.maximum(xin @ w1.T + b1, 0.0)
        s = h @ w2.T + b2
        return jax.nn.softmax(s, axis=1)

    def check(B, seed):
        kx_, kg_ = jax.random.split(jax.random.PRNGKey(seed))
        x = jax.random.normal(kx_, (B, feat_dim + 2), jnp.float32)
        geo = jax.random.normal(kg_, (B, 6), jnp.float32)
        out = jax.block_until_ready(agent_forward(x, geo, *params))
        ref = ref_forward(x, geo)
        assert out.shape == (B, 2)
        assert jnp.allclose(out, ref, atol=1e-4, rtol=1e-4)
        assert jnp.allclose(jnp.sum(out, axis=1), 1.0, atol=1e-5)

    check(8, 0)      # tiny single-block path
    check(260, 1)    # single-block path, B not a multiple of 8/128
    check(1300, 2)   # tiled path: tb=384, grid=4, partial last block (no pad)

    print("KERNEL_OK")
</pallas_src>

<mosaic_0001>
module attributes {stable_mosaic.version = 11 : i64} {
  func.func @_agent_kernel(%arg0: i32, %arg1: memref<8x26xf32, #tpu.memory_space<vmem>>, %arg2: memref<8x6xf32, #tpu.memory_space<vmem>>, %arg3: memref<26x32xf32, #tpu.memory_space<vmem>>, %arg4: memref<6x32xf32, #tpu.memory_space<vmem>>, %arg5: memref<1x32xf32, #tpu.memory_space<vmem>>, %arg6: memref<1x32xf32, #tpu.memory_space<vmem>>, %arg7: memref<1x1xf32, #tpu.memory_space<vmem>>, %arg8: memref<2x8xf32, #tpu.memory_space<vmem>>) attributes {dimension_semantics = [#tpu.dimension_semantics<parallel>], iteration_bounds = array<i64: 1>, scalar_prefetch = 0 : i64, scratch_operands = 0 : i64, tpu.core_type = #tpu.core_type<tc>, window_params = [{transform_indices = @transform_0, window_bounds = array<i64: 8, 26>}, {transform_indices = @transform_1, window_bounds = array<i64: 8, 6>}, {pipeline_mode = #tpu.pipeline_mode<synchronous>, transform_indices = @transform_2, window_bounds = array<i64: 26, 32>}, {pipeline_mode = #tpu.pipeline_mode<synchronous>, transform_indices = @transform_3, window_bounds = array<i64: 6, 32>}, {pipeline_mode = #tpu.pipeline_mode<synchronous>, transform_indices = @transform_4, window_bounds = array<i64: 1, 32>}, {pipeline_mode = #tpu.pipeline_mode<synchronous>, transform_indices = @transform_5, window_bounds = array<i64: 1, 32>}, {pipeline_mode = #tpu.pipeline_mode<synchronous>, transform_indices = @transform_6, window_bounds = array<i64: 1, 1>}, {transform_indices = @transform_7, window_bounds = array<i64: 2, 8>}]} {
    %c0 = arith.constant 0 : index
    %c0_0 = arith.constant 0 : index
    %0 = vector.load %arg1[%c0, %c0_0] : memref<8x26xf32, #tpu.memory_space<vmem>>, vector<8x26xf32>
    %c0_1 = arith.constant 0 : index
    %c0_2 = arith.constant 0 : index
    %1 = vector.load %arg2[%c0_1, %c0_2] : memref<8x6xf32, #tpu.memory_space<vmem>>, vector<8x6xf32>
    %c0_3 = arith.constant 0 : index
    %c0_4 = arith.constant 0 : index
    %2 = vector.load %arg3[%c0_3, %c0_4] : memref<26x32xf32, #tpu.memory_space<vmem>>, vector<26x32xf32>
    %cst = arith.constant dense<0.000000e+00> : vector<8x32xf32>
    %3 = tpu.matmul %0, %2, %cst {dimension_numbers = #tpu.dot_dimension_numbers<[1], [0], [0], [1], [0, 0, 1, 1], [], []>} : vector<8x26xf32>, vector<26x32xf32>, vector<8x32xf32> -> vector<8x32xf32>
    %c0_5 = arith.constant 0 : index
    %c0_6 = arith.constant 0 : index
    %4 = vector.load %arg4[%c0_5, %c0_6] : memref<6x32xf32, #tpu.memory_space<vmem>>, vector<6x32xf32>
    %cst_7 = arith.constant dense<0.000000e+00> : vector<8x32xf32>
    %5 = tpu.matmul %1, %4, %cst_7 {dimension_numbers = #tpu.dot_dimension_numbers<[1], [0], [0], [1], [0, 0, 1, 1], [], []>} : vector<8x6xf32>, vector<6x32xf32>, vector<8x32xf32> -> vector<8x32xf32>
    %6 = arith.addf %3, %5 : vector<8x32xf32>
    %c0_8 = arith.constant 0 : index
    %c0_9 = arith.constant 0 : index
    %7 = vector.load %arg5[%c0_8, %c0_9] : memref<1x32xf32, #tpu.memory_space<vmem>>, vector<1x32xf32>
    %8 = vector.broadcast %7 : vector<1x32xf32> to vector<8x32xf32>
    %9 = arith.addf %6, %8 : vector<8x32xf32>
    %cst_10 = arith.constant 0.000000e+00 : f32
    %10 = vector.broadcast %cst_10 : f32 to vector<8x32xf32>
    %11 = arith.maximumf %9, %10 : vector<8x32xf32>
    %c0_11 = arith.constant 0 : index
    %c0_12 = arith.constant 0 : index
    %12 = vector.load %arg6[%c0_11, %c0_12] : memref<1x32xf32, #tpu.memory_space<vmem>>, vector<1x32xf32>
    %cst_13 = arith.constant dense<0.000000e+00> : vector<1x8xf32>
    %13 = tpu.matmul %12, %11, %cst_13 {dimension_numbers = #tpu.dot_dimension_numbers<[1], [1], [0], [0], [0, 0, 1, 0], [], []>} : vector<1x32xf32>, vector<8x32xf32>, vector<1x8xf32> -> vector<1x8xf32>
    %c0_14 = arith.constant 0 : index
    %c0_15 = arith.constant 0 : index
    %14 = vector.load %arg7[%c0_14, %c0_15] : memref<1x1xf32, #tpu.memory_space<vmem>>, vector<1x1xf32>
    %15 = vector.broadcast %14 : vector<1x1xf32> to vector<1x8xf32>
    %16 = arith.addf %13, %15 : vector<1x8xf32>
    %cst_16 = arith.constant 0.000000e+00 : f32
    %17 = vector.broadcast %cst_16 : f32 to vector<1x8xf32>
    %18 = arith.subf %17, %16 : vector<1x8xf32>
    %19 = math.exp %18 : vector<1x8xf32>
    %cst_17 = arith.constant 1.000000e+00 : f32
    %20 = vector.broadcast %cst_17 : f32 to vector<1x8xf32>
    %21 = arith.addf %20, %19 : vector<1x8xf32>
    %cst_18 = arith.constant 1.000000e+00 : f32
    %22 = vector.broadcast %cst_18 : f32 to vector<1x8xf32>
    %23 = arith.divf %22, %21 : vector<1x8xf32>
    %cst_19 = arith.constant 1.000000e+00 : f32
    %24 = vector.broadcast %cst_19 : f32 to vector<1x8xf32>
    %25 = arith.subf %24, %23 : vector<1x8xf32>
    %26 = tpu.concatenate %23, %25 in 0 : vector<1x8xf32>, vector<1x8xf32> -> vector<2x8xf32>
    %c0_20 = arith.constant 0 : index
    %c0_21 = arith.constant 0 : index
    %27 = vector.load %arg8[%c0_20, %c0_21] : memref<2x8xf32, #tpu.memory_space<vmem>>, vector<2x8xf32>
    tpu.vector_store %arg8[%c0_20, %c0_21], %26 {strides = array<i32>} : memref<2x8xf32, #tpu.memory_space<vmem>>, vector<2x8xf32>,
    return
  }
  func.func @transform_0(%arg0: i32) -> (i32, i32) {
    %c0_i32 = arith.constant 0 : i32
    %c0_i32_0 = arith.constant 0 : i32
    return %arg0, %c0_i32 : i32, i32
  }
  func.func @transform_1(%arg0: i32) -> (i32, i32) {
    %c0_i32 = arith.constant 0 : i32
    %c0_i32_0 = arith.constant 0 : i32
    return %arg0, %c0_i32 : i32, i32
  }
  func.func @transform_2(%arg0: i32) -> (i32, i32) {
    %c0_i32 = arith.constant 0 : i32
    %c0_i32_0 = arith.constant 0 : i32
    %c0_i32_1 = arith.constant 0 : i32
    return %c0_i32, %c0_i32_0 : i32, i32
  }
  func.func @transform_3(%arg0: i32) -> (i32, i32) {
    %c0_i32 = arith.constant 0 : i32
    %c0_i32_0 = arith.constant 0 : i32
    %c0_i32_1 = arith.constant 0 : i32
    return %c0_i32, %c0_i32_0 : i32, i32
  }
  func.func @transform_4(%arg0: i32) -> (i32, i32) {
    %c0_i32 = arith.constant 0 : i32
    %c0_i32_0 = arith.constant 0 : i32
    %c0_i32_1 = arith.constant 0 : i32
    return %c0_i32, %c0_i32_0 : i32, i32
  }
  func.func @transform_5(%arg0: i32) -> (i32, i32) {
    %c0_i32 = arith.constant 0 : i32
    %c0_i32_0 = arith.constant 0 : i32
    %c0_i32_1 = arith.constant 0 : i32
    return %c0_i32, %c0_i32_0 : i32, i32
  }
  func.func @transform_6(%arg0: i32) -> (i32, i32) {
    %c0_i32 = arith.constant 0 : i32
    %c0_i32_0 = arith.constant 0 : i32
    %c0_i32_1 = arith.constant 0 : i32
    return %c0_i32, %c0_i32_0 : i32, i32
  }
  func.func @transform_7(%arg0: i32) -> (i32, i32) {
    %c0_i32 = arith.constant 0 : i32
    %c0_i32_0 = arith.constant 0 : i32
    return %c0_i32, %arg0 : i32, i32
  }
}

</mosaic_0001>

<llo_original>
// kernel: agent_forward.1
$region0: #{agent_forward.1}
  #allocation0 [shape = 'u32[]', space=smem, size = 0x4, offset = 0x4, fixed_abs, tag = 'smem constant byte address 0x4 - core index']
  #allocation1 [shape = 'u32[144,128]{1,0:T(1,128)}', space=vmem, size = 0x12000, scoped, tag = 'internal scratch']
  #allocation2 [shape = 'f32[1,1]{1,0:T(1,128)S(1)}', space=vmem, size = 0x200, scoped, tag = 'scoped memory for agent_forward.1']
  %s0 = inlined_call_operand.hbm [shape: f32[8,26], index: 0, kind: input, shape index: {}]
  %s1 = inlined_call_operand.hbm [shape: f32[8,6], index: 1, kind: input, shape index: {}]
  %s2 = inlined_call_operand.hbm [shape: f32[26,32], index: 2, kind: input, shape index: {}]
  %s3 = inlined_call_operand.vmem [shape: f32[6,32], index: 3, kind: input, shape index: {}]
  %s4 = inlined_call_operand.vmem [shape: f32[1,32], index: 4, kind: input, shape index: {}]
  %s5 = inlined_call_operand.vmem [shape: f32[1,32], index: 5, kind: input, shape index: {}]
  %s6 = inlined_call_operand.<no memory space> [shape: f32[1,1], index: 6, kind: input, shape index: {}]
  %s7 = inlined_call_operand.hbm [shape: f32[2,8], index: 7, kind: output, shape index: {}]
  %s8 = sld [smem:[#allocation0]]
  $region50: #{agent_forward.1} parent=0
    _
  %s10 = ssub.s32 1, %s8
  %s11 = scalar_select 0, %s10, %s8
  %v12 = vstv %s6
  %13 = vst [vmem:[#allocation2] sm:$0x1] %v12
  $region1: #{agent_forward.1} parent=0
    #allocation3 [shape = 'u8[4096]{0}', space=vmem, size = 0x1000, scoped, tag = 'input window, operand 0, single buffered']
    #allocation4 [shape = 's32[1]{0}', space=sflag, size = 0x4, scoped, tag = 'scoped memory for agent_forward.1']
    #allocation5 [shape = 's32[1]{0}', space=sflag, size = 0x4, scoped, tag = 'scoped memory for agent_forward.1']
    #allocation6 [shape = 'u8[4096]{0}', space=vmem, size = 0x1000, scoped, tag = 'input window, operand 1, single buffered']
    #allocation7 [shape = 's32[1]{0}', space=sflag, size = 0x4, scoped, tag = 'scoped memory for agent_forward.1']
    #allocation8 [shape = 'u8[16384]{0}', space=vmem, size = 0x4000, scoped, tag = 'input window, operand 2, single buffered']
    #allocation9 [shape = 'u8[1024]{0}', space=vmem, size = 0x400, scoped, tag = 'output window, operand 0, single buffered']
    %14 = vsyncpa [#allocation4], 0
    %15 = vsyncpa [#allocation7], 0
    %16 = vsyncpa [#allocation5], 0
    // Predicated region
    $region2: #{agent_forward.1} parent=1 // pred_check
      _
    $region3: #{agent_forward.1} parent=1 // pred_check_branch
      %18 = sbr.rel (0) target = $region5
    $region4: #{agent_forward.1} parent=1 // pred_region
      %s20 = ssub.s32 128, 128
      %21 = vsyncadd [#allocation4], %s20
      %s23 = sshll.u32 [#allocation3], 4
      %s24 = int_to_ptr.vmem [resolvable:$true] %s23
      %26 = dma.hbm_to_vmem [thread:$0]  %s0, 128, %s24, [#allocation4]
    $region5: #{agent_forward.1} parent=1 // pred_fallthru
      _
    // Predicated region
    $region6: #{agent_forward.1} parent=1 // pred_check
      _
    $region7: #{agent_forward.1} parent=1 // pred_check_branch
      %28 = sbr.rel (0) target = $region9
    $region8: #{agent_forward.1} parent=1 // pred_region
      %s30 = ssub.s32 128, 128
      %31 = vsyncadd [#allocation7], %s30
      %s33 = sshll.u32 [#allocation6], 4
      %s34 = int_to_ptr.vmem [resolvable:$true] %s33
      %36 = dma.hbm_to_vmem [thread:$0]  %s1, 128, %s34, [#allocation7]
    $region9: #{agent_forward.1} parent=1 // pred_fallthru
      _
    // Predicated region
    $region10: #{agent_forward.1} parent=1 // pred_check
      _
    $region11: #{agent_forward.1} parent=1 // pred_check_branch
      %38 = sbr.rel (0) target = $region13
    $region12: #{agent_forward.1} parent=1 // pred_region
      %s40 = ssub.s32 512, 512
      %41 = vsyncadd [#allocation7], %s40
      %s42 = sshll.u32 [#allocation8], 4
      %s43 = int_to_ptr.vmem [resolvable:$true] %s42
      %48 = dma.hbm_to_vmem [thread:$0]  %s2, 512, %s43, [#allocation7], 128, 128, 8
    $region13: #{agent_forward.1} parent=1 // pred_fallthru
      _
    // Predicated region
    $region14: #{agent_forward.1} parent=1 // pred_check
      _
    $region15: #{agent_forward.1} parent=1 // pred_check_branch
      %50 = sbr.rel (0) target = $region17
    $region16: #{agent_forward.1} parent=1 // pred_region
      _
    $region17: #{agent_forward.1} parent=1 // pred_fallthru
      _
    // Predicated region
    $region18: #{agent_forward.1} parent=1 // pred_check
      _
    $region19: #{agent_forward.1} parent=1 // pred_check_branch
      %52 = sbr.rel (0) target = $region21
    $region20: #{agent_forward.1} parent=1 // pred_region
      _
    $region21: #{agent_forward.1} parent=1 // pred_fallthru
      _
    // Predicated region
    $region22: #{agent_forward.1} parent=1 // pred_check
      _
    $region23: #{agent_forward.1} parent=1 // pred_check_branch
      %54 = sbr.rel (0) target = $region25
    $region24: #{agent_forward.1} parent=1 // pred_region
      _
    $region25: #{agent_forward.1} parent=1 // pred_fallthru
      _
    // Predicated region
    $region26: #{agent_forward.1} parent=1 // pred_check
      _
    $region27: #{agent_forward.1} parent=1 // pred_check_branch
      %56 = sbr.rel (0) target = $region29
    $region28: #{agent_forward.1} parent=1 // pred_region
      _
    $region29: #{agent_forward.1} parent=1 // pred_fallthru
      _
    // Predicated region
    $region30: #{agent_forward.1} parent=1 // pred_check
      _
    $region31: #{agent_forward.1} parent=1 // pred_check_branch
      %58 = sbr.rel (0) target = $region33
    $region32: #{agent_forward.1} parent=1 // pred_region
      %59 = dma.done [#allocation4], 128
    $region33: #{agent_forward.1} parent=1 // pred_fallthru
      _
    // Predicated region
    $region34: #{agent_forward.1} parent=1 // pred_check
      _
    $region35: #{agent_forward.1} parent=1 // pred_check_branch
      %61 = sbr.rel (0) target = $region37
    $region36: #{agent_forward.1} parent=1 // pred_region
      %62 = dma.done [#allocation7], 128
    $region37: #{agent_forward.1} parent=1 // pred_fallthru
      _
    // Predicated region
    $region38: #{agent_forward.1} parent=1 // pred_check
      _
    $region39: #{agent_forward.1} parent=1 // pred_check_branch
      %64 = sbr.rel (0) target = $region41
    $region40: #{agent_forward.1} parent=1 // pred_region
      %65 = dma.done [#allocation7], 512
    $region41: #{agent_forward.1} parent=1 // pred_fallthru
      _
    %v66 = vld [vmem:[#allocation3] sm:$0xff]
    %v67 = vld [vmem:[#allocation6] sm:$0xff]
    %v68 = vld [vmem:[#allocation8] sm:$0xff]
    %v69 = vld [vmem:[#allocation8 + $0x8] sm:$0xff]
    %v70 = vld [vmem:[#allocation8 + $0x10] sm:$0xff]
    %v71 = vld [vmem:[#allocation8 + $0x18] sm:$0x3]
    %v72 = vld [vmem:[%s3] sm:$0x3f]
    %vm73 = vcmask 48128
    %v75 = vsel %vm73, %v67, 0
    %vm77 = vcmask 1045504
    %v79 = vsel %vm77, %v72, 0
    %81 = vmatprep.subr.mxu0 0.0
    %82 = vmatpush1.msra.mxu0 %v79
    %83 = vmatprep.subr.mxu0 0.0
    %84 = vmatpush1.msra.mxu0 0.0
    %85 = vmatprep.subr.mxu0 0.0
    %86 = vmatpush1.msra.mxu0 0.0
    %87 = vmatprep.subr.mxu0 0.0
    %88 = vmatpush1.msra.mxu0 0.0
    %89 = vmatprep.subr.mxu0 0.0
    %90 = vmatpush1.msra.mxu0 0.0
    %91 = vmatprep.subr.mxu0 0.0
    %92 = vmatpush1.msra.mxu0 0.0
    %93 = vmatprep.subr.mxu0 0.0
    %94 = vmatpush1.msra.mxu0 0.0
    %95 = vmatprep.subr.mxu0 0.0
    %96 = vmatpush1.msra.mxu0 0.0
    %97 = vmatprep.subr.mxu0 0.0
    %98 = vmatpush1.msra.mxu0 0.0
    %99 = vmatprep.subr.mxu0 0.0
    %100 = vmatpush1.msra.mxu0 0.0
    %101 = vmatprep.subr.mxu0 0.0
    %102 = vmatpush1.msra.mxu0 0.0
    %103 = vmatprep.subr.mxu0 0.0
    %104 = vmatpush1.msra.mxu0 0.0
    %105 = vmatprep.subr.mxu0 0.0
    %106 = vmatpush1.msra.mxu0 0.0
    %107 = vmatprep.subr.mxu0 0.0
    %108 = vmatpush1.msra.mxu0 0.0
    %109 = vmatprep.subr.mxu0 0.0
    %110 = vmatpush1.msra.mxu0 0.0
    %111 = vmatprep.subr.mxu0 0.0
    %112 = vmatpush1.msra.mxu0 0.0
    %113 = vmatprep.subr.mxu0 0.0
    %114 = vmatpush1.msra.mxu0 0.0
    %115 = vmatprep.subr.mxu0 0.0
    %116 = vmatpush1.msra.mxu0 0.0
    %117 = vmatprep.subr.mxu0 0.0
    %118 = vmatpush1.msra.mxu0 0.0
    %119 = vmatprep.subr.mxu0 0.0
    %120 = vmatpush1.msra.mxu0 0.0
    %121 = vmatprep.subr.mxu0 0.0
    %122 = vmatpush1.msra.mxu0 0.0
    %123 = vmatprep.subr.mxu0 0.0
    %124 = vmatpush1.msra.mxu0 0.0
    %125 = vmatprep.subr.mxu0 0.0
    %126 = vmatpush1.msra.mxu0 0.0
    %127 = vmatprep.subr.mxu0 0.0
    %128 = vmatpush1.msra.mxu0 0.0
    %129 = vmatprep.subr.mxu0 0.0
    %130 = vmatpush1.msra.mxu0 0.0
    %131 = vmatprep.subr.mxu0 0.0
    %132 = vmatpush1.msra.mxu0 0.0
    %133 = vmatprep.subr.mxu0 0.0
    %134 = vmatpush1.msra.mxu0 0.0
    %135 = vmatprep.subr.mxu0 0.0
    %136 = vmatpush1.msra.mxu0 0.0
    %137 = vmatprep.subr.mxu0 0.0
    %138 = vmatpush1.msra.mxu0 0.0
    %139 = vmatprep.subr.mxu0 0.0
    %140 = vmatpush1.msra.mxu0 0.0
    %141 = vmatprep.subr.mxu0 0.0
    %142 = vmatpush1.msra.mxu0 0.0
    %143 = vmatprep.subr.mxu0 0.0
    %144 = vmatpush1.msra.mxu0 0.0
    %145 = vmatprep.mubr.f32.mxu0 0.0
    %146 = vmatmul.mubr.f32.gmra.mrb[0].mxu0 %v75
    %v147 = vpop.f32.mrb[0].mxu0
    %v148 = vadd.f32 0.0, %v147
    %v149 = vpop.f32.mrb[0].mxu0
    %150 = vdwg.mxu0
    %vm151 = vcmask 211968
    %v153 = vsel %vm151, %v66, 0
    %vm155 = vcmask 1041408
    %v157 = vsel %vm155, %v71, 0
    %159 = vmatprep.subr.mxu0 0.0
    %160 = vmatpush1.msra.mxu0 %v68
    %161 = vmatprep.subr.mxu0 0.0
    %162 = vmatpush1.msra.mxu0 %v69
    %163 = vmatprep.subr.mxu0 0.0
    %164 = vmatpush1.msra.mxu0 %v70
    %165 = vmatprep.subr.mxu0 0.0
    %166 = vmatpush1.msra.mxu0 %v157
    %167 = vmatprep.subr.mxu0 0.0
    %168 = vmatpush1.msra.mxu0 0.0
    %169 = vmatprep.subr.mxu0 0.0
    %170 = vmatpush1.msra.mxu0 0.0
    %171 = vmatprep.subr.mxu0 0.0
    %172 = vmatpush1.msra.mxu0 0.0
    %173 = vmatprep.subr.mxu0 0.0
    %174 = vmatpush1.msra.mxu0 0.0
    %175 = vmatprep.subr.mxu0 0.0
    %176 = vmatpush1.msra.mxu0 0.0
    %177 = vmatprep.subr.mxu0 0.0
    %178 = vmatpush1.msra.mxu0 0.0
    %179 = vmatprep.subr.mxu0 0.0
    %180 = vmatpush1.msra.mxu0 0.0
    %181 = vmatprep.subr.mxu0 0.0
    %182 = vmatpush1.msra.mxu0 0.0
    %183 = vmatprep.subr.mxu0 0.0
    %184 = vmatpush1.msra.mxu0 0.0
    %185 = vmatprep.subr.mxu0 0.0
    %186 = vmatpush1.msra.mxu0 0.0
    %187 = vmatprep.subr.mxu0 0.0
    %188 = vmatpush1.msra.mxu0 0.0
    %189 = vmatprep.subr.mxu0 0.0
    %190 = vmatpush1.msra.mxu0 0.0
    %191 = vmatprep.subr.mxu0 0.0
    %192 = vmatpush1.msra.mxu0 0.0
    %193 = vmatprep.subr.mxu0 0.0
    %194 = vmatpush1.msra.mxu0 0.0
    %195 = vmatprep.subr.mxu0 0.0
    %196 = vmatpush1.msra.mxu0 0.0
    %197 = vmatprep.subr.mxu0 0.0
    %198 = vmatpush1.msra.mxu0 0.0
    %199 = vmatprep.subr.mxu0 0.0
    %200 = vmatpush1.msra.mxu0 0.0
    %201 = vmatprep.subr.mxu0 0.0
    %202 = vmatpush1.msra.mxu0 0.0
    %203 = vmatprep.subr.mxu0 0.0
    %204 = vmatpush1.msra.mxu0 0.0
    %205 = vmatprep.subr.mxu0 0.0
    %206 = vmatpush1.msra.mxu0 0.0
    %207 = vmatprep.subr.mxu0 0.0
    %208 = vmatpush1.msra.mxu0 0.0
    %209 = vmatprep.subr.mxu0 0.0
    %210 = vmatpush1.msra.mxu0 0.0
    %211 = vmatprep.subr.mxu0 0.0
    %212 = vmatpush1.msra.mxu0 0.0
    %213 = vmatprep.subr.mxu0 0.0
    %214 = vmatpush1.msra.mxu0 0.0
    %215 = vmatprep.subr.mxu0 0.0
    %216 = vmatpush1.msra.mxu0 0.0
    %217 = vmatprep.subr.mxu0 0.0
    %218 = vmatpush1.msra.mxu0 0.0
    %219 = vmatprep.subr.mxu0 0.0
    %220 = vmatpush1.msra.mxu0 0.0
    %221 = vmatprep.subr.mxu0 0.0
    %222 = vmatpush1.msra.mxu0 0.0
    %223 = vmatprep.mubr.f32.mxu0 0.0
    %224 = vmatmul.mubr.f32.gmra.mrb[0].mxu0 %v153
    %v225 = vpop.f32.mrb[0].mxu0
    %v226 = vadd.f32 %v148, %v225
    %v227 = vpop.f32.mrb[0].mxu0
    %228 = vdwg.mxu0
    %v229 = vld [vmem:[%s4] sm:$0x1]
    %v231 = vlaneseq
    %v232 = vshrl.u32 %v231, 7
    %v233 = vsub.s32 0, %v232
    %v234 = vrot.slane %v229, %v233
    %v236 = vadd.f32 %v226, %v234
    %v237 = vmax.f32 %v236, 0.0
    %v238 = vld [vmem:[%s5] sm:$0x1]
    %v239 = vld [vmem:[#allocation2] sm:$0x1]
    %241 = vset.pattern.permute.xlu0 0
    %242 = vperm.xlu0 %241, %v239
    %v243 = vpop.permute.xlu0 %242
    %v245 = vlaneseq
    %v246 = vshrl.u32 %v245, 7
    %v247 = vsub.s32 0, %v246
    %v248 = vrot.slane %v243, %v247
    %vm249 = vcmask 261120
    %v251 = vsel %vm249, %v238, 0
    %v254 = vsel %vm249, %v237, 0
    %256 = vmatprep.subr.mxu0 0.0
    %257 = vmatpush1.xpose.msra.mxu0 %v254
    %258 = vmatprep.subr.mxu0 0.0
    %259 = vmatpush1.xpose.msra.mxu0 0.0
    %260 = vmatprep.subr.mxu0 0.0
    %261 = vmatpush1.xpose.msra.mxu0 0.0
    %262 = vmatprep.subr.mxu0 0.0
    %263 = vmatpush1.xpose.msra.mxu0 0.0
    %264 = vmatprep.subr.mxu0 0.0
    %265 = vmatpush1.xpose.msra.mxu0 0.0
    %266 = vmatprep.subr.mxu0 0.0
    %267 = vmatpush1.xpose.msra.mxu0 0.0
    %268 = vmatprep.subr.mxu0 0.0
    %269 = vmatpush1.xpose.msra.mxu0 0.0
    %270 = vmatprep.subr.mxu0 0.0
    %271 = vmatpush1.xpose.msra.mxu0 0.0
    %272 = vmatprep.subr.mxu0 0.0
    %273 = vmatpush1.xpose.msra.mxu0 0.0
    %274 = vmatprep.subr.mxu0 0.0
    %275 = vmatpush1.xpose.msra.mxu0 0.0
    %276 = vmatprep.subr.mxu0 0.0
    %277 = vmatpush1.xpose.msra.mxu0 0.0
    %278 = vmatprep.subr.mxu0 0.0
    %279 = vmatpush1.xpose.msra.mxu0 0.0
    %280 = vmatprep.subr.mxu0 0.0
    %281 = vmatpush1.xpose.msra.mxu0 0.0
    %282 = vmatprep.subr.mxu0 0.0
    %283 = vmatpush1.xpose.msra.mxu0 0.0
    %284 = vmatprep.subr.mxu0 0.0
    %285 = vmatpush1.xpose.msra.mxu0 0.0
    %286 = vmatprep.subr.mxu0 0.0
    %287 = vmatpush1.xpose.msra.mxu0 0.0
    %288 = vmatprep.subr.mxu0 0.0
    %289 = vmatpush1.xpose.msra.mxu0 0.0
    %290 = vmatprep.subr.mxu0 0.0
    %291 = vmatpush1.xpose.msra.mxu0 0.0
    %292 = vmatprep.subr.mxu0 0.0
    %293 = vmatpush1.xpose.msra.mxu0 0.0
    %294 = vmatprep.subr.mxu0 0.0
    %295 = vmatpush1.xpose.msra.mxu0 0.0
    %296 = vmatprep.subr.mxu0 0.0
    %297 = vmatpush1.xpose.msra.mxu0 0.0
    %298 = vmatprep.subr.mxu0 0.0
    %299 = vmatpush1.xpose.msra.mxu0 0.0
    %300 = vmatprep.subr.mxu0 0.0
    %301 = vmatpush1.xpose.msra.mxu0 0.0
    %302 = vmatprep.subr.mxu0 0.0
    %303 = vmatpush1.xpose.msra.mxu0 0.0
    %304 = vmatprep.subr.mxu0 0.0
    %305 = vmatpush1.xpose.msra.mxu0 0.0
    %306 = vmatprep.subr.mxu0 0.0
    %307 = vmatpush1.xpose.msra.mxu0 0.0
    %308 = vmatprep.subr.mxu0 0.0
    %309 = vmatpush1.xpose.msra.mxu0 0.0
    %310 = vmatprep.subr.mxu0 0.0
    %311 = vmatpush1.xpose.msra.mxu0 0.0
    %312 = vmatprep.subr.mxu0 0.0
    %313 = vmatpush1.xpose.msra.mxu0 0.0
    %314 = vmatprep.subr.mxu0 0.0
    %315 = vmatpush1.xpose.msra.mxu0 0.0
    %316 = vmatprep.subr.mxu0 0.0
    %317 = vmatpush1.xpose.msra.mxu0 0.0
    %318 = vmatprep.subr.mxu0 0.0
    %319 = vmatpush1.xpose.msra.mxu0 0.0
    %320 = vmatprep.mubr.f32.mxu0 0.0
    %321 = vmatmul.mubr.f32.gmra.mrb[0].mxu0 %v251
    %v322 = vpop.f32.mrb[0].mxu0
    %v323 = vadd.f32 %v248, %v322
    %v324 = vpop.f32.mrb[0].mxu0
    %325 = vdwg.mxu0
    %v326 = vsub.f32 0.0, %v323
    %v327 = vmul.f32 %v326, 1.442695
    %v328 = vpow.pop %v327
    %v329 = vadd.f32 %v328, 1.0
    %v330 = vrcp.pop %v329
    %v331 = vmul.f32 1.0, %v330
    %v332 = vsub.f32 1.0, %v331
    %v334 = vrot.slane %v332, 7
    %vm336 = vcmask 1040384
    %v337 = vsel %vm336, %v331, %v334
    %vm338 = vcmask 58368
    %339 = vst.msk [vmem:[#allocation9] sm:$0x3] %vm338, %v337
    // Predicated region
    $region42: #{agent_forward.1} parent=1 // pred_check
      _
    $region43: #{agent_forward.1} parent=1 // pred_check_branch
      %341 = sbr.rel (0) target = $region45
    $region44: #{agent_forward.1} parent=1 // pred_region
      %s343 = ssub.s32 32, 32
      %344 = vsyncadd [#allocation5], %s343
      %s346 = sshll.u32 [#allocation9], 4
      %s347 = int_to_ptr.vmem [resolvable:$true] %s346
      %349 = dma.vmem_to_hbm [thread:$0]  %s347, 32, %s7, [#allocation5]
    $region45: #{agent_forward.1} parent=1 // pred_fallthru
      _
    // Predicated region
    $region46: #{agent_forward.1} parent=1 // pred_check
      _
    $region47: #{agent_forward.1} parent=1 // pred_check_branch
      %351 = sbr.rel (0) target = $region49
    $region48: #{agent_forward.1} parent=1 // pred_region
      %352 = dma.done [#allocation5], 32
    $region49: #{agent_forward.1} parent=1 // pred_fallthru
      _
    %353 = vsyncpa [#allocation4], 1
    %354 = vsyncpa [#allocation7], 1
    %355 = vsyncpa [#allocation5], 1

</llo_original>
